<compile_context>
chip_gen: v7x
topology: tpu7x:2x2x1
jax: 0.10.0
libtpu: 0.0.40
codegen_flags: <defaults>
</compile_context>

<pallas_src>
import functools

import jax
import jax.numpy as jnp
from jax.experimental import pallas as pl
from jax.experimental.pallas import tpu as pltpu


def _hinge_partial_kernel(pred_ref, gold_ref, out_ref, *, n_rows, need_mask):
    """One tile: write the (8, C) partial sum of relu(1 - pred * (2*gold - 1)).

    Steady state is DMA + VPU only (no cross-lane reduce, no scalar RMW chain);
    the single tiny cross-lane reduction is done outside the kernel.
    """
    block_rows, cols = pred_ref.shape

    pred = pred_ref[...].astype(jnp.float32)
    t = gold_ref[...].astype(jnp.float32) * 2.0 - 1.0      # {0,1} -> {-1,+1}
    h = jnp.maximum(1.0 - pred * t, 0.0)

    if need_mask:
        # Ragged last tile: rows at or beyond the true row count contribute 0.
        i = pl.program_id(0)
        row_ids = i * block_rows + jax.lax.broadcasted_iota(
            jnp.int32, (block_rows, cols), 0
        )
        h = jnp.where(row_ids < n_rows, h, 0.0)

    # (block_rows, C) -> (block_rows//8, 8, C) -> (8, C): each (8, C) slab is a
    # native f32 tile, so this is a layout-friendly stack of VPU adds.
    partial = h.reshape(block_rows // 8, 8, cols).sum(axis=0)
    out_ref[0] = partial


def _choose_block_rows(n_rows, n_cols, pred_bytes, gold_bytes,
                       vmem_budget_bytes=12 * 1024 * 1024, max_rows=2048):
    """Largest multiple-of-8 row block whose double-buffered inputs fit VMEM.

    Budget of ~12 MiB keeps the kernel inside v5e's 16 MiB scoped-VMEM default
    (and trivially inside the v6e/v7x 32 MiB defaults / v7x 64 MiB physical).
    """
    per_row = 2 * (pred_bytes + gold_bytes) * n_cols      # 2 bufs per input
    br = max(8, min(max_rows, vmem_budget_bytes // per_row))
    br = (br // 8) * 8
    if n_rows >= 8:
        br = min(br, (n_rows // 8) * 8)                   # don't exceed the array
    return max(br, 8)


def hinge_loss(y_pred: jax.Array, y_gold: jax.Array, *, block_rows: int | None = None):
    """Pallas hinge loss. Arbitrary-shaped y_pred / y_gold (same shape). Scalar out."""
    assert y_pred.shape == y_gold.shape
    orig_dtype = y_pred.dtype

    # Flatten to 2-D [rows, cols]; the last dim maps onto the lane axis.
    if y_pred.ndim == 1:
        y_pred = y_pred[None, :]
        y_gold = y_gold[None, :]
    elif y_pred.ndim > 2:
        y_pred = y_pred.reshape(-1, y_pred.shape[-1])
        y_gold = y_gold.reshape(-1, y_gold.shape[-1])

    # Ship labels narrow: bool -> int8 (1 B/elem). Integer / float labels keep
    # their dtype (callers should supply int8 labels to minimize HBM traffic);
    # the cast to pred dtype happens in-register inside the kernel.
    if y_gold.dtype == jnp.bool_:
        y_gold = y_gold.astype(jnp.int8)

    R, C = y_pred.shape
    if block_rows is None:
        block_rows = _choose_block_rows(
            R, C, jnp.dtype(y_pred.dtype).itemsize, jnp.dtype(y_gold.dtype).itemsize
        )
    assert block_rows % 8 == 0

    num_tiles = -(-R // block_rows)           # cdiv
    need_mask = (R % block_rows) != 0

    kernel = functools.partial(_hinge_partial_kernel, n_rows=R, need_mask=need_mask)

    partials = pl.pallas_call(
        kernel,
        out_shape=jax.ShapeDtypeStruct((num_tiles, 8, C), jnp.float32),
        grid=(num_tiles,),
        in_specs=[
            pl.BlockSpec((block_rows, C), lambda i: (i, 0)),
            pl.BlockSpec((block_rows, C), lambda i: (i, 0)),
        ],
        out_specs=pl.BlockSpec((1, 8, C), lambda i: (i, 0, 0)),
        compiler_params=pltpu.CompilerParams(
            # Every tile writes its own output block -> fully independent, so
            # the axis can be sharded across TensorCores (2x on v7x megacore).
            dimension_semantics=("parallel",),
        ),
    )(y_pred, y_gold)

    # Tiny final reduction + mean over the TRUE element count (f32 accumulate).
    total = jnp.sum(partials, dtype=jnp.float32)
    mean = total / jnp.float32(R * C)
    return mean.astype(orig_dtype)


def hinge_loss_ref(y_pred, y_gold):
    t = y_gold.astype(y_pred.dtype)
    t = (t - 0.5) * 2.0
    h = -(y_pred * t) + 1.0
    return jnp.mean(jnp.maximum(h, 0.0))


if __name__ == "__main__":
    key = jax.random.PRNGKey(0)
    k1, k2, k3, k4 = jax.random.split(key, 4)

    # Small, tile-friendly test shape.
    rows, cols = 16, 128
    y_pred = jax.random.normal(k1, (rows, cols), dtype=jnp.float32)
    y_gold = jax.random.bernoulli(k2, 0.5, (rows, cols)).astype(jnp.int8)

    out = hinge_loss(y_pred, y_gold)
    out = jax.block_until_ready(out)
    ref = hinge_loss_ref(y_pred, y_gold)
    assert jnp.allclose(out, ref, rtol=1e-5, atol=1e-5), (out, ref)

    # Ragged-rows path: forces a masked last tile (24 rows, 16-row blocks).
    rows2 = 24
    y_pred2 = jax.random.normal(k3, (rows2, cols), dtype=jnp.float32)
    y_gold2 = jax.random.bernoulli(k4, 0.5, (rows2, cols)).astype(jnp.int8)
    out2 = jax.block_until_ready(hinge_loss(y_pred2, y_gold2, block_rows=16))
    ref2 = hinge_loss_ref(y_pred2, y_gold2)
    assert jnp.allclose(out2, ref2, rtol=1e-5, atol=1e-5), (out2, ref2)

    print("KERNEL_OK")
</pallas_src>

<mosaic_0001>
module attributes {stable_mosaic.version = 11 : i64} {
  func.func @_hinge_partial_kernel(%arg0: i32, %arg1: memref<16x128xf32, #tpu.memory_space<vmem>>, %arg2: memref<16x128xi8, #tpu.memory_space<vmem>>, %arg3: memref<1x8x128xf32, #tpu.memory_space<vmem>>) attributes {dimension_semantics = [#tpu.dimension_semantics<parallel>], iteration_bounds = array<i64: 1>, scalar_prefetch = 0 : i64, scratch_operands = 0 : i64, tpu.core_type = #tpu.core_type<tc>, window_params = [{transform_indices = @transform_0, window_bounds = array<i64: 16, 128>}, {transform_indices = @transform_1, window_bounds = array<i64: 16, 128>}, {transform_indices = @transform_2, window_bounds = array<i64: 1, 8, 128>}]} {
    %c0 = arith.constant 0 : index
    %c0_0 = arith.constant 0 : index
    %0 = vector.load %arg1[%c0, %c0_0] : memref<16x128xf32, #tpu.memory_space<vmem>>, vector<16x128xf32>
    %c0_1 = arith.constant 0 : index
    %c0_2 = arith.constant 0 : index
    %1 = vector.load %arg2[%c0_1, %c0_2] : memref<16x128xi8, #tpu.memory_space<vmem>>, vector<16x128xi8>
    %2 = arith.sitofp %1 : vector<16x128xi8> to vector<16x128xf32>
    %cst = arith.constant 2.000000e+00 : f32
    %3 = vector.broadcast %cst : f32 to vector<16x128xf32>
    %4 = arith.mulf %2, %3 : vector<16x128xf32>
    %cst_3 = arith.constant 1.000000e+00 : f32
    %5 = vector.broadcast %cst_3 : f32 to vector<16x128xf32>
    %6 = arith.subf %4, %5 : vector<16x128xf32>
    %7 = arith.mulf %0, %6 : vector<16x128xf32>
    %cst_4 = arith.constant 1.000000e+00 : f32
    %8 = vector.broadcast %cst_4 : f32 to vector<16x128xf32>
    %9 = arith.subf %8, %7 : vector<16x128xf32>
    %cst_5 = arith.constant 0.000000e+00 : f32
    %10 = vector.broadcast %cst_5 : f32 to vector<16x128xf32>
    %11 = arith.maximumf %9, %10 : vector<16x128xf32>
    %12 = vector.shape_cast %11 : vector<16x128xf32> to vector<2x8x128xf32>
    %cst_6 = arith.constant dense<0.000000e+00> : vector<8x128xf32>
    %13 = vector.multi_reduction <add>, %12, %cst_6 [0] : vector<2x8x128xf32> to vector<8x128xf32>
    %c0_7 = arith.constant 0 : index
    %c0_8 = arith.constant 0 : index
    %c0_9 = arith.constant 0 : index
    %14 = vector.load %arg3[%c0_7, %c0_8, %c0_9] : memref<1x8x128xf32, #tpu.memory_space<vmem>>, vector<1x8x128xf32>
    %15 = vector.shape_cast %14 : vector<1x8x128xf32> to vector<8x128xf32>
    %16 = vector.shape_cast %13 : vector<8x128xf32> to vector<1x8x128xf32>
    tpu.vector_store %arg3[%c0_7, %c0_8, %c0_9], %16 {strides = array<i32>} : memref<1x8x128xf32, #tpu.memory_space<vmem>>, vector<1x8x128xf32>,
    return
  }
  func.func @transform_0(%arg0: i32) -> (i32, i32) {
    %c0_i32 = arith.constant 0 : i32
    %c0_i32_0 = arith.constant 0 : i32
    return %arg0, %c0_i32 : i32, i32
  }
  func.func @transform_1(%arg0: i32) -> (i32, i32) {
    %c0_i32 = arith.constant 0 : i32
    %c0_i32_0 = arith.constant 0 : i32
    return %arg0, %c0_i32 : i32, i32
  }
  func.func @transform_2(%arg0: i32) -> (i32, i32, i32) {
    %c0_i32 = arith.constant 0 : i32
    %c0_i32_0 = arith.constant 0 : i32
    %c0_i32_1 = arith.constant 0 : i32
    return %arg0, %c0_i32, %c0_i32_0 : i32, i32, i32
  }
}

</mosaic_0001>

<llo_original>
// kernel: tpu_custom_call.1
$region0: #{tpu_custom_call.1}
  #allocation0 [shape = 'u32[]', space=smem, size = 0x4, offset = 0x4, fixed_abs, tag = 'smem constant byte address 0x4 - core index']
  #allocation1 [shape = 'u32[144,128]{1,0:T(1,128)}', space=vmem, size = 0x12000, scoped, tag = 'internal scratch']
  %s0 = inlined_call_operand.hbm [shape: f32[16,128], index: 0, kind: input, shape index: {}]
  %s1 = inlined_call_operand.hbm [shape: s8[16,128], index: 1, kind: input, shape index: {}]
  %s2 = inlined_call_operand.hbm [shape: f32[1,8,128], index: 2, kind: output, shape index: {}]
  %s3 = sld [smem:[#allocation0]]
  $region26: #{tpu_custom_call.1} parent=0
    _
  %s5 = ssub.s32 1, %s3
  %s6 = scalar_select 0, %s5, %s3
  $region1: #{tpu_custom_call.1} parent=0
    #allocation2 [shape = 'u8[8192]{0}', space=vmem, size = 0x2000, scoped, tag = 'input window, operand 0, single buffered']
    #allocation3 [shape = 's32[1]{0}', space=sflag, size = 0x4, scoped, tag = 'scoped memory for tpu_custom_call.1']
    #allocation4 [shape = 's32[1]{0}', space=sflag, size = 0x4, scoped, tag = 'scoped memory for tpu_custom_call.1']
    #allocation5 [shape = 'u8[2048]{0}', space=vmem, size = 0x800, scoped, tag = 'input window, operand 1, single buffered']
    #allocation6 [shape = 's32[1]{0}', space=sflag, size = 0x4, scoped, tag = 'scoped memory for tpu_custom_call.1']
    #allocation7 [shape = 'u8[4096]{0}', space=vmem, size = 0x1000, scoped, tag = 'output window, operand 0, single buffered']
    %7 = vsyncpa [#allocation3], 0
    %8 = vsyncpa [#allocation6], 0
    %9 = vsyncpa [#allocation4], 0
    // Predicated region
    $region2: #{tpu_custom_call.1} parent=1 // pred_check
      _
    $region3: #{tpu_custom_call.1} parent=1 // pred_check_branch
      %11 = sbr.rel (0) target = $region5
    $region4: #{tpu_custom_call.1} parent=1 // pred_region
      %s13 = ssub.s32 256, 256
      %14 = vsyncadd [#allocation3], %s13
      %s15 = sshll.u32 [#allocation2], 4
      %s16 = int_to_ptr.vmem [resolvable:$true] %s15
      %21 = dma.hbm_to_vmem [thread:$0]  %s0, 256, %s16, [#allocation3], 128, 128, 8
    $region5: #{tpu_custom_call.1} parent=1 // pred_fallthru
      _
    // Predicated region
    $region6: #{tpu_custom_call.1} parent=1 // pred_check
      _
    $region7: #{tpu_custom_call.1} parent=1 // pred_check_branch
      %23 = sbr.rel (0) target = $region9
    $region8: #{tpu_custom_call.1} parent=1 // pred_region
      %s25 = ssub.s32 64, 64
      %26 = vsyncadd [#allocation6], %s25
      %s27 = sshll.u32 [#allocation5], 4
      %s28 = int_to_ptr.vmem [resolvable:$true] %s27
      %33 = dma.hbm_to_vmem [thread:$0]  %s1, 64, %s28, [#allocation6], 32, 32, 2
    $region9: #{tpu_custom_call.1} parent=1 // pred_fallthru
      _
    // Predicated region
    $region10: #{tpu_custom_call.1} parent=1 // pred_check
      _
    $region11: #{tpu_custom_call.1} parent=1 // pred_check_branch
      %35 = sbr.rel (0) target = $region13
    $region12: #{tpu_custom_call.1} parent=1 // pred_region
      %36 = dma.done [#allocation3], 256
    $region13: #{tpu_custom_call.1} parent=1 // pred_fallthru
      _
    // Predicated region
    $region14: #{tpu_custom_call.1} parent=1 // pred_check
      _
    $region15: #{tpu_custom_call.1} parent=1 // pred_check_branch
      %38 = sbr.rel (0) target = $region17
    $region16: #{tpu_custom_call.1} parent=1 // pred_region
      %39 = dma.done [#allocation6], 64
    $region17: #{tpu_custom_call.1} parent=1 // pred_fallthru
      _
    %v40 = vld [vmem:[#allocation2] sm:$0xff]
    %v41 = vld [vmem:[#allocation2 + $0x8] sm:$0xff]
    %v42 = vld [vmem:[#allocation5] sm:$0x3]
    %v43 = vld [vmem:[#allocation5 + $0x2] sm:$0x3]
    %v44 = vunpack.c.0.s8 %v42
    %v45 = vunpack.c.0.s8 %v43
    %v46 = vcvt.s32.f32 %v44
    %v47 = vcvt.s32.f32 %v45
    %v48 = vmul.f32 %v46, 2.0
    %v49 = vmul.f32 %v47, 2.0
    %v50 = vsub.f32 %v48, 1.0
    %v51 = vsub.f32 %v49, 1.0
    %v52 = vmul.f32 %v40, %v50
    %v53 = vmul.f32 %v41, %v51
    %v54 = vsub.f32 1.0, %v52
    %v55 = vsub.f32 1.0, %v53
    %v56 = vmax.f32 %v54, 0.0
    %v57 = vmax.f32 %v55, 0.0
    %v58 = vadd.f32 %v56, %v57
    %59 = vst [vmem:[#allocation7] sm:$0xff] %v58
    // Predicated region
    $region18: #{tpu_custom_call.1} parent=1 // pred_check
      _
    $region19: #{tpu_custom_call.1} parent=1 // pred_check_branch
      %61 = sbr.rel (0) target = $region21
    $region20: #{tpu_custom_call.1} parent=1 // pred_region
      %s63 = ssub.s32 128, 128
      %64 = vsyncadd [#allocation4], %s63
      %s66 = sshll.u32 [#allocation7], 4
      %s67 = int_to_ptr.vmem [resolvable:$true] %s66
      %69 = dma.vmem_to_hbm [thread:$0]  %s67, 128, %s2, [#allocation4]
    $region21: #{tpu_custom_call.1} parent=1 // pred_fallthru
      _
    // Predicated region
    $region22: #{tpu_custom_call.1} parent=1 // pred_check
      _
    $region23: #{tpu_custom_call.1} parent=1 // pred_check_branch
      %71 = sbr.rel (0) target = $region25
    $region24: #{tpu_custom_call.1} parent=1 // pred_region
      %72 = dma.done [#allocation4], 128
    $region25: #{tpu_custom_call.1} parent=1 // pred_fallthru
      _
    %73 = vsyncpa [#allocation3], 1
    %74 = vsyncpa [#allocation6], 1
    %75 = vsyncpa [#allocation4], 1

</llo_original>
